<compile_context>
chip_gen: v5e
topology: v5e:2x2
jax: 0.10.0
libtpu: 0.0.40
codegen_flags: <defaults>
</compile_context>

<pallas_src>
import jax
import jax.numpy as jnp
from jax.experimental import pallas as pl
from jax.experimental.pallas import tpu as pltpu

C = 128          # hidden channels (fixed by the module: conv1/conv2 are 128->128)
HEAD = 5         # conv3 output channels: 2 objectness + 3 center offsets
HEAD_PAD = 8     # sublane-pad the fused head output to a full vreg sublane group
BN_EPS = 1e-5    # PyTorch BatchNorm1d default eps
MAX_TK = 2048    # lane-tile upper bound over K (working set stays ~1 MiB)


def _proposal_head_kernel(x_ref, w1_ref, b1_ref, w2_ref, b2_ref,
                          w3_ref, b3_ref, out_ref):
    # x_ref: (C, TK) bf16 channel-major features (one batch element, one K tile)
    x = x_ref[...]

    # conv1 + folded bn1 + relu : bf16 MXU operands, f32 accumulate + epilogue
    h = jnp.dot(w1_ref[...], x, preferred_element_type=jnp.float32)
    h = jnp.maximum(h + b1_ref[...], 0.0)

    # conv2 + folded bn2 + relu
    h = jnp.dot(w2_ref[...], h.astype(jnp.bfloat16),
                preferred_element_type=jnp.float32)
    h = jnp.maximum(h + b2_ref[...], 0.0)

    # fused conv3 head (objectness | center-offset | zero pad) -> (HEAD_PAD, TK)
    # K sits on lanes -> lane-dense store.
    out_ref[...] = (jnp.dot(w3_ref[...], h.astype(jnp.bfloat16),
                            preferred_element_type=jnp.float32)
                    + b3_ref[...])


def votepose_proposal_head(features_nck, aggregated_xyz, params):
    """features_nck: (B, C, K) float32 (PyTorch NCK layout);
       aggregated_xyz: (B, K, 3) float32."""
    B, Cc, K = features_nck.shape
    assert Cc == C

    xyz = aggregated_xyz.astype(jnp.float32)

    # bf16 MXU operands; the (B, C, K) layout is consumed as-is (no transpose).
    x = features_nck.astype(jnp.bfloat16)

    # fold BatchNorm (eval mode) + conv bias into the weights (transposed form):
    #   relu(s * (W @ x + b) + t) == relu((s[:,None]*W) @ x + (s*b + t)[:,None])
    #   s = gamma / sqrt(var + eps), t = beta - mean * s
    def bn_fold(gamma, beta, mean, var):
        s = gamma / jnp.sqrt(var + BN_EPS)
        t = beta - mean * s
        return s, t

    s1, t1 = bn_fold(params["bn1_gamma"], params["bn1_beta"],
                     params["bn1_mean"], params["bn1_var"])
    s2, t2 = bn_fold(params["bn2_gamma"], params["bn2_beta"],
                     params["bn2_mean"], params["bn2_var"])

    # Conv1d weights are (out, in, 1) in PyTorch -> (out, in) matrices (W @ x_ck)
    w1 = (params["conv1_w"][:, :, 0] * s1[:, None]).astype(jnp.bfloat16)   # (C, C)
    b1 = (params["conv1_b"] * s1 + t1).reshape(C, 1).astype(jnp.float32)
    w2 = (params["conv2_w"][:, :, 0] * s2[:, None]).astype(jnp.bfloat16)   # (C, C)
    b2 = (params["conv2_b"] * s2 + t2).reshape(C, 1).astype(jnp.float32)

    # fused + sublane-padded conv3 head: rows [0:2]=objectness, [2:5]=center off
    w3 = jnp.zeros((HEAD_PAD, C), jnp.float32).at[:HEAD, :].set(
        params["conv3_w"][:, :, 0]).astype(jnp.bfloat16)
    b3 = jnp.zeros((HEAD_PAD, 1), jnp.float32).at[:HEAD, 0].set(
        params["conv3_b"])

    # K (lane) tiling: multiples of 128 when possible, otherwise the full K.
    if K >= 128:
        TK = min(MAX_TK, (K // 128) * 128)
    else:
        TK = K                     # full-extent block (small-K case, e.g. K=64)
    n_k = pl.cdiv(K, TK)           # ragged last tile is fine: OOB lanes discarded

    const = lambda shape: pl.BlockSpec(shape, lambda b, k: (0,) * len(shape))

    cost = pl.CostEstimate(
        flops=2 * B * K * (2 * C * C + C * HEAD_PAD),
        transcendentals=0,
        bytes_accessed=(B * C * K * 2                 # bf16 features in
                        + B * HEAD_PAD * K * 4        # f32 head out
                        + 2 * C * C * 2 + HEAD_PAD * C * 2   # bf16 weights
                        + 2 * C * 4 + HEAD_PAD * 4),         # f32 biases
    )

    out = pl.pallas_call(
        _proposal_head_kernel,
        grid=(B, n_k),
        in_specs=[
            pl.BlockSpec((None, C, TK), lambda b, k: (b, 0, k)),   # features
            const((C, C)), const((C, 1)),                # conv1 (+bn1 folded)
            const((C, C)), const((C, 1)),                # conv2 (+bn2 folded)
            const((HEAD_PAD, C)), const((HEAD_PAD, 1)),  # fused conv3 head
        ],
        out_specs=pl.BlockSpec((None, HEAD_PAD, TK), lambda b, k: (b, 0, k)),
        out_shape=jax.ShapeDtypeStruct((B, HEAD_PAD, K), jnp.float32),
        compiler_params=pltpu.CompilerParams(
            dimension_semantics=("parallel", "parallel")),
        cost_estimate=cost,
    )(x, w1, b1, w2, b2, w3, b3)

    # tiny epilogue on the (B, 8, K) head output (cheap XLA ops, fused by XLA)
    objectness_scores = jnp.transpose(out[:, 0:2, :], (0, 2, 1))   # (B, K, 2)
    center = xyz + jnp.transpose(out[:, 2:5, :], (0, 2, 1))        # (B, K, 3)

    end_points = {
        "aggregated_vote_xyz": xyz,
        "objectness_scores": objectness_scores,
        "center": center,
    }
    return end_points


def _reference(features_nck, xyz, params):
    """Pure-JAX f32 reference of the same forward (for correctness check)."""
    x = jnp.transpose(features_nck, (0, 2, 1))
    def bn(h, g, b, m, v):
        return (h - m) / jnp.sqrt(v + BN_EPS) * g + b
    h = jnp.einsum("bkc,oc->bko", x, params["conv1_w"][:, :, 0]) + params["conv1_b"]
    h = jax.nn.relu(bn(h, params["bn1_gamma"], params["bn1_beta"],
                       params["bn1_mean"], params["bn1_var"]))
    h = jnp.einsum("bkc,oc->bko", h, params["conv2_w"][:, :, 0]) + params["conv2_b"]
    h = jax.nn.relu(bn(h, params["bn2_gamma"], params["bn2_beta"],
                       params["bn2_mean"], params["bn2_var"]))
    net = jnp.einsum("bkc,oc->bko", h, params["conv3_w"][:, :, 0]) + params["conv3_b"]
    return net[:, :, 0:2], xyz + net[:, :, 2:5]


def make_params(key):
    ks = jax.random.split(key, 12)
    p = {
        "conv1_w": 0.05 * jax.random.normal(ks[0], (C, C, 1), jnp.float32),
        "conv1_b": 0.05 * jax.random.normal(ks[1], (C,), jnp.float32),
        "conv2_w": 0.05 * jax.random.normal(ks[2], (C, C, 1), jnp.float32),
        "conv2_b": 0.05 * jax.random.normal(ks[3], (C,), jnp.float32),
        "conv3_w": 0.05 * jax.random.normal(ks[4], (HEAD, C, 1), jnp.float32),
        "conv3_b": 0.05 * jax.random.normal(ks[5], (HEAD,), jnp.float32),
        "bn1_gamma": 1.0 + 0.1 * jax.random.normal(ks[6], (C,), jnp.float32),
        "bn1_beta": 0.1 * jax.random.normal(ks[7], (C,), jnp.float32),
        "bn1_mean": 0.1 * jax.random.normal(ks[8], (C,), jnp.float32),
        "bn1_var": 1.0 + 0.1 * jnp.abs(jax.random.normal(ks[9], (C,), jnp.float32)),
        "bn2_gamma": 1.0 + 0.1 * jax.random.normal(ks[10], (C,), jnp.float32),
        "bn2_beta": 0.1 * jax.random.normal(ks[11], (C,), jnp.float32),
        "bn2_mean": jnp.zeros((C,), jnp.float32),
        "bn2_var": jnp.ones((C,), jnp.float32),
    }
    return p


if __name__ == "__main__":
    B = 2                  # batch
    NUM_PROPOSAL = 64      # proposals after vote aggregation

    key = jax.random.PRNGKey(0)
    k_feat, k_xyz, k_par = jax.random.split(key, 3)

    # Aggregated proposal features (B, C=128, K) and proposal xyz (B, K, 3)
    features = jax.random.normal(k_feat, (B, C, NUM_PROPOSAL), jnp.float32)
    agg_xyz = jax.random.normal(k_xyz, (B, NUM_PROPOSAL, 3), jnp.float32)
    params = make_params(k_par)

    end_points = votepose_proposal_head(features, agg_xyz, params)
    obj = jax.block_until_ready(end_points["objectness_scores"])
    center = jax.block_until_ready(end_points["center"])

    # sanity check against plain-JAX f32 reference (loose tol: bf16 MXU operands)
    ref_obj, ref_center = _reference(features, agg_xyz, params)
    assert obj.shape == (B, NUM_PROPOSAL, 2)
    assert center.shape == (B, NUM_PROPOSAL, 3)
    assert jnp.allclose(obj, ref_obj, atol=5e-2, rtol=5e-2)
    assert jnp.allclose(center, ref_center, atol=5e-2, rtol=5e-2)

    print("KERNEL_OK")
</pallas_src>

<mosaic_0001>
module attributes {stable_mosaic.version = 11 : i64} {
  func.func @_proposal_head_kernel(%arg0: i32, %arg1: i32, %arg2: memref<1x128x64xbf16, #tpu.memory_space<vmem>>, %arg3: memref<128x128xbf16, #tpu.memory_space<vmem>>, %arg4: memref<128x1xf32, #tpu.memory_space<vmem>>, %arg5: memref<128x128xbf16, #tpu.memory_space<vmem>>, %arg6: memref<128x1xf32, #tpu.memory_space<vmem>>, %arg7: memref<8x128xbf16, #tpu.memory_space<vmem>>, %arg8: memref<8x1xf32, #tpu.memory_space<vmem>>, %arg9: memref<1x8x64xf32, #tpu.memory_space<vmem>>) attributes {dimension_semantics = [#tpu.dimension_semantics<parallel>, #tpu.dimension_semantics<parallel>], iteration_bounds = array<i64: 2, 1>, scalar_prefetch = 0 : i64, scratch_operands = 0 : i64, tpu.core_type = #tpu.core_type<tc>, window_params = [{transform_indices = @transform_0, window_bounds = array<i64: 1, 128, 64>}, {pipeline_mode = #tpu.pipeline_mode<synchronous>, transform_indices = @transform_1, window_bounds = array<i64: 128, 128>}, {pipeline_mode = #tpu.pipeline_mode<synchronous>, transform_indices = @transform_2, window_bounds = array<i64: 128, 1>}, {pipeline_mode = #tpu.pipeline_mode<synchronous>, transform_indices = @transform_3, window_bounds = array<i64: 128, 128>}, {pipeline_mode = #tpu.pipeline_mode<synchronous>, transform_indices = @transform_4, window_bounds = array<i64: 128, 1>}, {pipeline_mode = #tpu.pipeline_mode<synchronous>, transform_indices = @transform_5, window_bounds = array<i64: 8, 128>}, {pipeline_mode = #tpu.pipeline_mode<synchronous>, transform_indices = @transform_6, window_bounds = array<i64: 8, 1>}, {transform_indices = @transform_7, window_bounds = array<i64: 1, 8, 64>}]} {
    %c0 = arith.constant 0 : index
    %c0_0 = arith.constant 0 : index
    %c0_1 = arith.constant 0 : index
    %0 = vector.load %arg2[%c0, %c0_0, %c0_1] : memref<1x128x64xbf16, #tpu.memory_space<vmem>>, vector<1x128x64xbf16>
    %1 = vector.shape_cast %0 : vector<1x128x64xbf16> to vector<128x64xbf16>
    %c0_2 = arith.constant 0 : index
    %c0_3 = arith.constant 0 : index
    %2 = vector.load %arg3[%c0_2, %c0_3] : memref<128x128xbf16, #tpu.memory_space<vmem>>, vector<128x128xbf16>
    %cst = arith.constant dense<0.000000e+00> : vector<128x64xf32>
    %3 = tpu.matmul %2, %1, %cst {dimension_numbers = #tpu.dot_dimension_numbers<[1], [0], [0], [1], [0, 0, 1, 1], [], []>} : vector<128x128xbf16>, vector<128x64xbf16>, vector<128x64xf32> -> vector<128x64xf32>
    %c0_4 = arith.constant 0 : index
    %c0_5 = arith.constant 0 : index
    %4 = vector.load %arg4[%c0_4, %c0_5] : memref<128x1xf32, #tpu.memory_space<vmem>>, vector<128x1xf32>
    %5 = vector.broadcast %4 : vector<128x1xf32> to vector<128x64xf32>
    %6 = arith.addf %3, %5 : vector<128x64xf32>
    %cst_6 = arith.constant 0.000000e+00 : f32
    %7 = vector.broadcast %cst_6 : f32 to vector<128x64xf32>
    %8 = arith.maximumf %6, %7 : vector<128x64xf32>
    %c0_7 = arith.constant 0 : index
    %c0_8 = arith.constant 0 : index
    %9 = vector.load %arg5[%c0_7, %c0_8] : memref<128x128xbf16, #tpu.memory_space<vmem>>, vector<128x128xbf16>
    %10 = arith.truncf %8 : vector<128x64xf32> to vector<128x64xbf16>
    %cst_9 = arith.constant dense<0.000000e+00> : vector<128x64xf32>
    %11 = tpu.matmul %9, %10, %cst_9 {dimension_numbers = #tpu.dot_dimension_numbers<[1], [0], [0], [1], [0, 0, 1, 1], [], []>} : vector<128x128xbf16>, vector<128x64xbf16>, vector<128x64xf32> -> vector<128x64xf32>
    %c0_10 = arith.constant 0 : index
    %c0_11 = arith.constant 0 : index
    %12 = vector.load %arg6[%c0_10, %c0_11] : memref<128x1xf32, #tpu.memory_space<vmem>>, vector<128x1xf32>
    %13 = vector.broadcast %12 : vector<128x1xf32> to vector<128x64xf32>
    %14 = arith.addf %11, %13 : vector<128x64xf32>
    %cst_12 = arith.constant 0.000000e+00 : f32
    %15 = vector.broadcast %cst_12 : f32 to vector<128x64xf32>
    %16 = arith.maximumf %14, %15 : vector<128x64xf32>
    %c0_13 = arith.constant 0 : index
    %c0_14 = arith.constant 0 : index
    %17 = vector.load %arg7[%c0_13, %c0_14] : memref<8x128xbf16, #tpu.memory_space<vmem>>, vector<8x128xbf16>
    %18 = arith.truncf %16 : vector<128x64xf32> to vector<128x64xbf16>
    %cst_15 = arith.constant dense<0.000000e+00> : vector<8x64xf32>
    %19 = tpu.matmul %17, %18, %cst_15 {dimension_numbers = #tpu.dot_dimension_numbers<[1], [0], [0], [1], [0, 0, 1, 1], [], []>} : vector<8x128xbf16>, vector<128x64xbf16>, vector<8x64xf32> -> vector<8x64xf32>
    %c0_16 = arith.constant 0 : index
    %c0_17 = arith.constant 0 : index
    %20 = vector.load %arg8[%c0_16, %c0_17] : memref<8x1xf32, #tpu.memory_space<vmem>>, vector<8x1xf32>
    %21 = vector.broadcast %20 : vector<8x1xf32> to vector<8x64xf32>
    %22 = arith.addf %19, %21 : vector<8x64xf32>
    %c0_18 = arith.constant 0 : index
    %c0_19 = arith.constant 0 : index
    %c0_20 = arith.constant 0 : index
    %23 = vector.load %arg9[%c0_18, %c0_19, %c0_20] : memref<1x8x64xf32, #tpu.memory_space<vmem>>, vector<1x8x64xf32>
    %24 = vector.shape_cast %23 : vector<1x8x64xf32> to vector<8x64xf32>
    %25 = vector.shape_cast %22 : vector<8x64xf32> to vector<1x8x64xf32>
    tpu.vector_store %arg9[%c0_18, %c0_19, %c0_20], %25 {strides = array<i32>} : memref<1x8x64xf32, #tpu.memory_space<vmem>>, vector<1x8x64xf32>,
    return
  }
  func.func @transform_0(%arg0: i32, %arg1: i32) -> (i32, i32, i32) {
    %c0_i32 = arith.constant 0 : i32
    %c0_i32_0 = arith.constant 0 : i32
    return %arg0, %c0_i32, %arg1 : i32, i32, i32
  }
  func.func @transform_1(%arg0: i32, %arg1: i32) -> (i32, i32) {
    %c0_i32 = arith.constant 0 : i32
    %c0_i32_0 = arith.constant 0 : i32
    %c0_i32_1 = arith.constant 0 : i32
    return %c0_i32, %c0_i32_0 : i32, i32
  }
  func.func @transform_2(%arg0: i32, %arg1: i32) -> (i32, i32) {
    %c0_i32 = arith.constant 0 : i32
    %c0_i32_0 = arith.constant 0 : i32
    %c0_i32_1 = arith.constant 0 : i32
    return %c0_i32, %c0_i32_0 : i32, i32
  }
  func.func @transform_3(%arg0: i32, %arg1: i32) -> (i32, i32) {
    %c0_i32 = arith.constant 0 : i32
    %c0_i32_0 = arith.constant 0 : i32
    %c0_i32_1 = arith.constant 0 : i32
    return %c0_i32, %c0_i32_0 : i32, i32
  }
  func.func @transform_4(%arg0: i32, %arg1: i32) -> (i32, i32) {
    %c0_i32 = arith.constant 0 : i32
    %c0_i32_0 = arith.constant 0 : i32
    %c0_i32_1 = arith.constant 0 : i32
    return %c0_i32, %c0_i32_0 : i32, i32
  }
  func.func @transform_5(%arg0: i32, %arg1: i32) -> (i32, i32) {
    %c0_i32 = arith.constant 0 : i32
    %c0_i32_0 = arith.constant 0 : i32
    %c0_i32_1 = arith.constant 0 : i32
    return %c0_i32, %c0_i32_0 : i32, i32
  }
  func.func @transform_6(%arg0: i32, %arg1: i32) -> (i32, i32) {
    %c0_i32 = arith.constant 0 : i32
    %c0_i32_0 = arith.constant 0 : i32
    %c0_i32_1 = arith.constant 0 : i32
    return %c0_i32, %c0_i32_0 : i32, i32
  }
  func.func @transform_7(%arg0: i32, %arg1: i32) -> (i32, i32, i32) {
    %c0_i32 = arith.constant 0 : i32
    %c0_i32_0 = arith.constant 0 : i32
    return %arg0, %c0_i32, %arg1 : i32, i32, i32
  }
}

</mosaic_0001>

<llo_original>
// kernel: tpu_custom_call.1
$region0: #{tpu_custom_call.1}
  #allocation0 [shape = 'u32[]', space=smem, size = 0x4, offset = 0x4, fixed_abs, tag = 'smem constant byte address 0x4 - core index']
  #allocation1 [shape = 'u32[72,128]{1,0:T(1,128)}', space=vmem, size = 0x9000, scoped, tag = 'internal scratch']
  %s0 = inlined_call_operand.vmem [shape: bf16[2,128,64], index: 0, kind: input, shape index: {}]
  %s1 = inlined_call_operand.vmem [shape: bf16[128,128], index: 1, kind: input, shape index: {}]
  %s2 = inlined_call_operand.vmem [shape: f32[128,1], index: 2, kind: input, shape index: {}]
  %s3 = inlined_call_operand.vmem [shape: bf16[128,128], index: 3, kind: input, shape index: {}]
  %s4 = inlined_call_operand.vmem [shape: f32[128,1], index: 4, kind: input, shape index: {}]
  %s5 = inlined_call_operand.vmem [shape: bf16[8,128], index: 5, kind: input, shape index: {}]
  %s6 = inlined_call_operand.vmem [shape: f32[8,1], index: 6, kind: input, shape index: {}]
  %s7 = inlined_call_operand.hbm [shape: f32[2,8,64], index: 7, kind: output, shape index: {}]
  %s8 = sld [smem:[#allocation0]]
  $region61: #{tpu_custom_call.1} parent=0
    _
  %s10 = ssub.s32 1, %s8
  %s11 = scalar_select 0, %s10, %s8
  $region1: #{tpu_custom_call.1} parent=0
    #allocation2 [shape = 'u8[8192]{0}', space=vmem, size = 0x2000, scoped, tag = 'output window, operand 0']
    #allocation3 [shape = 's32[2]{0}', space=sflag, size = 0x8, scoped, tag = 'scoped memory for tpu_custom_call.1']
    %12 = vsyncpa [#allocation3], 0
    %s13 = scalar_lea.sflag [#allocation3], 1
    %14 = vsyncpa %s13, 0
    loop: start=0, step=1, limit=4
    $region2: #{tpu_custom_call.1} parent=1 // loop_pre_header
      _
    $region3: #{tpu_custom_call.1} parent=1 // loop_header
      %s16 = sphi 0, %s20
      %p17 = scmp.ge.s32.totalorder %s16, 4
      %s23 = sphi 0, %s35
      %s24 = sphi 0, %s31
      %s25 = sphi 0, %s23
      %s26 = sphi 0, %s24
      %s27 = sphi 0, %s25
      %s28 = sphi 0, %s26
      %s40 = sphi 0, %s42
      %s43 = sphi 0, %s40
      %s44 = sphi 0, %s43
      %s60 = sphi 0, %s44
      %s64 = sphi 0, %s64
      %s66 = sphi 0, %s64
      %s67 = sphi 0, %s66
      %s81 = sphi 0, %s67
      %s85 = sphi 0, %s85
      %s87 = sphi 0, %s85
      %s88 = sphi 0, %s87
      %s102 = sphi 0, %s88
      %s106 = sphi 0, %s106
      %s108 = sphi 0, %s106
      %s109 = sphi 0, %s108
      %s123 = sphi 0, %s109
      %s127 = sphi 0, %s127
      %s129 = sphi 0, %s127
      %s130 = sphi 0, %s129
      %s144 = sphi 0, %s130
      %s148 = sphi 0, %s148
      %s150 = sphi 0, %s148
      %s151 = sphi 0, %s150
      %s165 = sphi 0, %s151
      %s169 = sphi 0, %s169
      %s171 = sphi 0, %s169
      %s172 = sphi 0, %s171
      %s186 = sphi 0, %s172
      %s194 = sphi 0, %s196
      %s197 = sphi 0, %s194
      %s198 = sphi 0, %s197
      %s214 = sphi 0, %s198
    $region4: #{tpu_custom_call.1} parent=1 // loop_header_branch
      %19 = sbr.rel (%p17) target = $region8
    $region5: #{tpu_custom_call.1} parent=1 // loop_body
      %s21 = ssub.s32 %s16, 1
      %s22 = ssub.s32 %s16, 2
      %s29 = sadd.s32 1, %s24
      %p30 = scmp.ge.s32.totalorder %s29, 1
      %s31 = scalar_select %p30, 0, %s29
      %s32 = sadd.s32 1, %s23
      %s33 = scalar_select %p30, %s32, %s23
      %p34 = scmp.ge.s32.totalorder %s33, 2
      %s35 = scalar_select %p34, 0, %s33
      %s36 = ssub.s32 %s23, %s35
      %s37 = ssub.s32 %s24, %s31
      %s38 = sor.u32 %s36, %s37
      %p39 = scmp.eq.s32.totalorder %s38, 0
      %s41 = sadd.s32 %s40, 1
      %s42 = scalar_select %p39, %s40, %s41
      %p45 = pneg %p39
      %p46 = scmp.eq.s32.totalorder %s16, 1
      %p47 = por %p45, %p46
      %p48 = scmp.ne.s32.totalorder %s40, %s43
      %p49 = scmp.eq.s32.totalorder %s16, 0
      %p50 = por %p48, %p49
      %p51 = scmp.ne.s32.totalorder %s40, %s43
      %p52 = scmp.eq.s32.totalorder %s21, 1
      %p53 = por %p51, %p52
      %p54 = scmp.ne.s32.totalorder %s43, %s44
      %p55 = scmp.eq.s32.totalorder %s21, 0
      %p56 = por %p54, %p55
      %p57 = scmp.ne.s32.totalorder %s43, %s44
      %p58 = scmp.eq.s32.totalorder %s22, 1
      %p59 = por %p57, %p58
      %p61 = scmp.ne.s32.totalorder %s44, %s60
      %p62 = scmp.eq.s32.totalorder %s22, 0
      %p63 = por %p61, %p62
      %s65 = sadd.s32 %s64, 1
      %p68 = scmp.eq.s32.totalorder %s16, 1
      %p69 = scmp.ne.s32.totalorder %s64, %s66
      %p70 = scmp.eq.s32.totalorder %s16, 0
      %p71 = por %p69, %p70
      %p72 = scmp.ne.s32.totalorder %s64, %s66
      %p73 = scmp.eq.s32.totalorder %s21, 1
      %p74 = por %p72, %p73
      %p75 = scmp.ne.s32.totalorder %s66, %s67
      %p76 = scmp.eq.s32.totalorder %s21, 0
      %p77 = por %p75, %p76
      %p78 = scmp.ne.s32.totalorder %s66, %s67
      %p79 = scmp.eq.s32.totalorder %s22, 1
      %p80 = por %p78, %p79
      %p82 = scmp.ne.s32.totalorder %s67, %s81
      %p83 = scmp.eq.s32.totalorder %s22, 0
      %p84 = por %p82, %p83
      %s86 = sadd.s32 %s85, 1
      %p89 = scmp.eq.s32.totalorder %s16, 1
      %p90 = scmp.ne.s32.totalorder %s85, %s87
      %p91 = scmp.eq.s32.totalorder %s16, 0
      %p92 = por %p90, %p91
      %p93 = scmp.ne.s32.totalorder %s85, %s87
      %p94 = scmp.eq.s32.totalorder %s21, 1
      %p95 = por %p93, %p94
      %p96 = scmp.ne.s32.totalorder %s87, %s88
      %p97 = scmp.eq.s32.totalorder %s21, 0
      %p98 = por %p96, %p97
      %p99 = scmp.ne.s32.totalorder %s87, %s88
      %p100 = scmp.eq.s32.totalorder %s22, 1
      %p101 = por %p99, %p100
      %p103 = scmp.ne.s32.totalorder %s88, %s102
      %p104 = scmp.eq.s32.totalorder %s22, 0
      %p105 = por %p103, %p104
      %s107 = sadd.s32 %s106, 1
      %p110 = scmp.eq.s32.totalorder %s16, 1
      %p111 = scmp.ne.s32.totalorder %s106, %s108
      %p112 = scmp.eq.s32.totalorder %s16, 0
      %p113 = por %p111, %p112
      %p114 = scmp.ne.s32.totalorder %s106, %s108
      %p115 = scmp.eq.s32.totalorder %s21, 1
      %p116 = por %p114, %p115
      %p117 = scmp.ne.s32.totalorder %s108, %s109
      %p118 = scmp.eq.s32.totalorder %s21, 0
      %p119 = por %p117, %p118
      %p120 = scmp.ne.s32.totalorder %s108, %s109
      %p121 = scmp.eq.s32.totalorder %s22, 1
      %p122 = por %p120, %p121
      %p124 = scmp.ne.s32.totalorder %s109, %s123
      %p125 = scmp.eq.s32.totalorder %s22, 0
      %p126 = por %p124, %p125
      %s128 = sadd.s32 %s127, 1
      %p131 = scmp.eq.s32.totalorder %s16, 1
      %p132 = scmp.ne.s32.totalorder %s127, %s129
      %p133 = scmp.eq.s32.totalorder %s16, 0
      %p134 = por %p132, %p133
      %p135 = scmp.ne.s32.totalorder %s127, %s129
      %p136 = scmp.eq.s32.totalorder %s21, 1
      %p137 = por %p135, %p136
      %p138 = scmp.ne.s32.totalorder %s129, %s130
      %p139 = scmp.eq.s32.totalorder %s21, 0
      %p140 = por %p138, %p139
      %p141 = scmp.ne.s32.totalorder %s129, %s130
      %p142 = scmp.eq.s32.totalorder %s22, 1
      %p143 = por %p141, %p142
      %p145 = scmp.ne.s32.totalorder %s130, %s144
      %p146 = scmp.eq.s32.totalorder %s22, 0
      %p147 = por %p145, %p146
      %s149 = sadd.s32 %s148, 1
      %p152 = scmp.eq.s32.totalorder %s16, 1
      %p153 = scmp.ne.s32.totalorder %s148, %s150
      %p154 = scmp.eq.s32.totalorder %s16, 0
      %p155 = por %p153, %p154
      %p156 = scmp.ne.s32.totalorder %s148, %s150
      %p157 = scmp.eq.s32.totalorder %s21, 1
      %p158 = por %p156, %p157
      %p159 = scmp.ne.s32.totalorder %s150, %s151
      %p160 = scmp.eq.s32.totalorder %s21, 0
      %p161 = por %p159, %p160
      %p162 = scmp.ne.s32.totalorder %s150, %s151
      %p163 = scmp.eq.s32.totalorder %s22, 1
      %p164 = por %p162, %p163
      %p166 = scmp.ne.s32.totalorder %s151, %s165
      %p167 = scmp.eq.s32.totalorder %s22, 0
      %p168 = por %p166, %p167
      %s170 = sadd.s32 %s169, 1
      %p173 = scmp.eq.s32.totalorder %s16, 1
      %p174 = scmp.ne.s32.totalorder %s169, %s171
      %p175 = scmp.eq.s32.totalorder %s16, 0
      %p176 = por %p174, %p175
      %p177 = scmp.ne.s32.totalorder %s169, %s171
      %p178 = scmp.eq.s32.totalorder %s21, 1
      %p179 = por %p177, %p178
      %p180 = scmp.ne.s32.totalorder %s171, %s172
      %p181 = scmp.eq.s32.totalorder %s21, 0
      %p182 = por %p180, %p181
      %p183 = scmp.ne.s32.totalorder %s171, %s172
      %p184 = scmp.eq.s32.totalorder %s22, 1
      %p185 = por %p183, %p184
      %p187 = scmp.ne.s32.totalorder %s172, %s186
      %p188 = scmp.eq.s32.totalorder %s22, 0
      %p189 = por %p187, %p188
      %s190 = ssub.s32 %s23, %s35
      %s191 = ssub.s32 %s24, %s31
      %s192 = sor.u32 %s190, %s191
      %p193 = scmp.eq.s32.totalorder %s192, 0
      %s195 = sadd.s32 %s194, 1
      %s196 = scalar_select %p193, %s194, %s195
      %p199 = pneg %p193
      %p200 = scmp.eq.s32.totalorder %s16, 1
      %p201 = por %p199, %p200
      %p202 = scmp.ne.s32.totalorder %s194, %s197
      %p203 = scmp.eq.s32.totalorder %s16, 0
      %p204 = por %p202, %p203
      %p205 = scmp.ne.s32.totalorder %s194, %s197
      %p206 = scmp.eq.s32.totalorder %s21, 1
      %p207 = por %p205, %p206
      %p208 = scmp.ne.s32.totalorder %s197, %s198
      %p209 = scmp.eq.s32.totalorder %s21, 0
      %p210 = por %p208, %p209
      %p211 = scmp.ne.s32.totalorder %s197, %s198
      %p212 = scmp.eq.s32.totalorder %s22, 1
      %p213 = por %p211, %p212
      %p215 = scmp.ne.s32.totalorder %s198, %s214
      %p216 = scmp.eq.s32.totalorder %s22, 0
      %p217 = por %p215, %p216
      %p218 = scmp.le.s32.totalorder 1, %s16
      %p219 = scmp.lt.s32.totalorder %s16, 3
      %p220 = pnand %p218, %p219
      %p221 = pneg %p220
      // Predicated region
      $region9: #{tpu_custom_call.1} parent=5 // pred_check
        _
      $region10: #{tpu_custom_call.1} parent=5 // pred_check_branch
        %223 = sbr.rel (%p220) target = $region12
      $region11: #{tpu_custom_call.1} parent=5 // pred_region
        %s224 = ssub.s32 %s16, 1
        // Predicated region
        $region13: #{tpu_custom_call.1} parent=11 // pred_check
          %p225 = pneg %p77
        $region14: #{tpu_custom_call.1} parent=11 // pred_check_branch
          %227 = sbr.rel (%p225) target = $region16
        $region15: #{tpu_custom_call.1} parent=11 // pred_region
          _
        $region16: #{tpu_custom_call.1} parent=11 // pred_fallthru
          _
        // Predicated region
        $region17: #{tpu_custom_call.1} parent=11 // pred_check
          %p228 = pneg %p98
        $region18: #{tpu_custom_call.1} parent=11 // pred_check_branch
          %230 = sbr.rel (%p228) target = $region20
        $region19: #{tpu_custom_call.1} parent=11 // pred_region
          _
        $region20: #{tpu_custom_call.1} parent=11 // pred_fallthru
          _
        // Predicated region
        $region21: #{tpu_custom_call.1} parent=11 // pred_check
          %p231 = pneg %p119
        $region22: #{tpu_custom_call.1} parent=11 // pred_check_branch
          %233 = sbr.rel (%p231) target = $region24
        $region23: #{tpu_custom_call.1} parent=11 // pred_region
          _
        $region24: #{tpu_custom_call.1} parent=11 // pred_fallthru
          _
        // Predicated region
        $region25: #{tpu_custom_call.1} parent=11 // pred_check
          %p234 = pneg %p140
        $region26: #{tpu_custom_call.1} parent=11 // pred_check_branch
          %236 = sbr.rel (%p234) target = $region28
        $region27: #{tpu_custom_call.1} parent=11 // pred_region
          _
        $region28: #{tpu_custom_call.1} parent=11 // pred_fallthru
          _
        // Predicated region
        $region29: #{tpu_custom_call.1} parent=11 // pred_check
          %p237 = pneg %p161
        $region30: #{tpu_custom_call.1} parent=11 // pred_check_branch
          %239 = sbr.rel (%p237) target = $region32
        $region31: #{tpu_custom_call.1} parent=11 // pred_region
          _
        $region32: #{tpu_custom_call.1} parent=11 // pred_fallthru
          _
        // Predicated region
        $region33: #{tpu_custom_call.1} parent=11 // pred_check
          %p240 = pneg %p182
        $region34: #{tpu_custom_call.1} parent=11 // pred_check_branch
          %242 = sbr.rel (%p240) target = $region36
        $region35: #{tpu_custom_call.1} parent=11 // pred_region
          _
        $region36: #{tpu_custom_call.1} parent=11 // pred_fallthru
          _
      $region12: #{tpu_custom_call.1} parent=5 // pred_fallthru
        _
      %p243 = scmp.lt.s32.totalorder %s16, 2
      // Predicated region
      $region37: #{tpu_custom_call.1} parent=5 // pred_check
        %p244 = pneg %p243
      $region38: #{tpu_custom_call.1} parent=5 // pred_check_branch
        %246 = sbr.rel (%p244) target = $region40
      $region39: #{tpu_custom_call.1} parent=5 // pred_region
        // Predicated region
        $region41: #{tpu_custom_call.1} parent=39 // pred_check
          %p247 = pneg %p50
        $region42: #{tpu_custom_call.1} parent=39 // pred_check_branch
          %249 = sbr.rel (%p247) target = $region44
        $region43: #{tpu_custom_call.1} parent=39 // pred_region
          %p250 = scmp.lt.s32.totalorder %s23, 1
          %s251 = scalar_select %p250, %s23, 1
          %p252 = scmp.lt.s32.totalorder %s24, 0
          %s253 = scalar_select %p252, %s24, 0
          %s254 = smul.addr %s251, 16
          %s255 = sadd.s32 %s253, %s254
          %s256 = smul.addr %s255, 4
          %s257 = scalar_lea.vmem %s0, %s256
        $region44: #{tpu_custom_call.1} parent=39 // pred_fallthru
          _
      $region40: #{tpu_custom_call.1} parent=5 // pred_fallthru
        _
      %p258 = scmp.le.s32.totalorder 1, %s16
      %p259 = scmp.lt.s32.totalorder %s16, 3
      %p260 = pnand %p258, %p259
      %p261 = pneg %p260
      // Predicated region
      $region45: #{tpu_custom_call.1} parent=5 // pred_check
        _
      $region46: #{tpu_custom_call.1} parent=5 // pred_check_branch
        %263 = sbr.rel (%p260) target = $region48
      $region47: #{tpu_custom_call.1} parent=5 // pred_region
        %s264 = ssub.s32 %s16, 1
        %p265 = scmp.lt.s32.totalorder %s25, 1
        %s266 = scalar_select %p265, %s25, 1
        %p267 = scmp.lt.s32.totalorder %s26, 0
        %s268 = scalar_select %p267, %s26, 0
        %s269 = smul.addr %s266, 16
        %s270 = sadd.s32 %s268, %s269
        %s271 = smul.addr %s270, 4
        %s272 = scalar_lea.vmem %s0, %s271
        %p273 = pneg %p56
        %p274 = pneg %p53
        %p275 = pneg %p77
        %p276 = pneg %p74
        %p277 = pneg %p98
        %p278 = pneg %p95
        %p279 = pneg %p119
        %p280 = pneg %p116
        %p281 = pneg %p140
        %p282 = pneg %p137
        %p283 = pneg %p161
        %p284 = pneg %p158
        %p285 = pneg %p182
        %p286 = pneg %p179
        %p287 = pneg %p210
        %p288 = pneg %p207
        %s289 = sand.u32 %s197, 1
        %s290 = scalar_lea.sflag [#allocation3], %s289
        %s291 = sand.u32 %s197, 1
        %s292 = smul.addr %s291, 8
        %s293 = scalar_lea.vmem [#allocation2], %s292
        %p294 = scmp.lt.s32.totalorder %s25, 1
        %s295 = scalar_select %p294, %s25, 1
        %p296 = scmp.lt.s32.totalorder %s26, 0
        %s297 = scalar_select %p296, %s26, 0
        %s298 = smul.addr %s295, 16
        %s299 = sadd.s32 %s297, %s298
        %s300 = smul.addr %s299, 4
        %s301 = scalar_lea.vmem %s0, %s300
        %v302 = vld [vmem:[%s301] sm:$0xf]
        %v303 = vld [vmem:[%s301 + $0x4] sm:$0xf]
        %v304 = vld [vmem:[%s301 + $0x8] sm:$0xf]
        %v305 = vld [vmem:[%s301 + $0xc] sm:$0xf]
        %v306 = vld [vmem:[%s301 + $0x10] sm:$0xf]
        %v307 = vld [vmem:[%s301 + $0x14] sm:$0xf]
        %v308 = vld [vmem:[%s301 + $0x18] sm:$0xf]
        %v309 = vld [vmem:[%s301 + $0x1c] sm:$0xf]
        %v310 = vld [vmem:[%s301 + $0x20] sm:$0xf]
        %v311 = vld [vmem:[%s301 + $0x24] sm:$0xf]
        %v312 = vld [vmem:[%s301 + $0x28] sm:$0xf]
        %v313 = vld [vmem:[%s301 + $0x2c] sm:$0xf]
        %v314 = vld [vmem:[%s301 + $0x30] sm:$0xf]
        %v315 = vld [vmem:[%s301 + $0x34] sm:$0xf]
        %v316 = vld [vmem:[%s301 + $0x38] sm:$0xf]
        %v317 = vld [vmem:[%s301 + $0x3c] sm:$0xf]
        %v318 = vld [vmem:[%s1] sm:$0xf]
        %v319 = vld [vmem:[%s1 + $0x4] sm:$0xf]
        %v320 = vld [vmem:[%s1 + $0x8] sm:$0xf]
        %v321 = vld [vmem:[%s1 + $0xc] sm:$0xf]
        %v322 = vld [vmem:[%s1 + $0x10] sm:$0xf]
        %v323 = vld [vmem:[%s1 + $0x14] sm:$0xf]
        %v324 = vld [vmem:[%s1 + $0x18] sm:$0xf]
        %v325 = vld [vmem:[%s1 + $0x1c] sm:$0xf]
        %v326 = vld [vmem:[%s1 + $0x20] sm:$0xf]
        %v327 = vld [vmem:[%s1 + $0x24] sm:$0xf]
        %v328 = vld [vmem:[%s1 + $0x28] sm:$0xf]
        %v329 = vld [vmem:[%s1 + $0x2c] sm:$0xf]
        %v330 = vld [vmem:[%s1 + $0x30] sm:$0xf]
        %v331 = vld [vmem:[%s1 + $0x34] sm:$0xf]
        %v332 = vld [vmem:[%s1 + $0x38] sm:$0xf]
        %v333 = vld [vmem:[%s1 + $0x3c] sm:$0xf]
        %v334 = vld [vmem:[%s2] sm:$0xff]
        %v335 = vld [vmem:[%s2 + $0x8] sm:$0xff]
        %v336 = vld [vmem:[%s2 + $0x10] sm:$0xff]
        %v337 = vld [vmem:[%s2 + $0x18] sm:$0xff]
        %v338 = vld [vmem:[%s2 + $0x20] sm:$0xff]
        %v339 = vld [vmem:[%s2 + $0x28] sm:$0xff]
        %v340 = vld [vmem:[%s2 + $0x30] sm:$0xff]
        %v341 = vld [vmem:[%s2 + $0x38] sm:$0xff]
        %v342 = vld [vmem:[%s2 + $0x40] sm:$0xff]
        %v343 = vld [vmem:[%s2 + $0x48] sm:$0xff]
        %v344 = vld [vmem:[%s2 + $0x50] sm:$0xff]
        %v345 = vld [vmem:[%s2 + $0x58] sm:$0xff]
        %v346 = vld [vmem:[%s2 + $0x60] sm:$0xff]
        %v347 = vld [vmem:[%s2 + $0x68] sm:$0xff]
        %v348 = vld [vmem:[%s2 + $0x70] sm:$0xff]
        %v349 = vld [vmem:[%s2 + $0x78] sm:$0xff]
        %351 = vset.pattern.permute.xlu0 0
        %352 = vperm.xlu0 %351, %v334
        %v353 = vpop.permute.xlu0 %352
        %356 = vset.pattern.permute.xlu0 0
        %357 = vperm.xlu0 %356, %v335
        %v358 = vpop.permute.xlu0 %357
        %361 = vset.pattern.permute.xlu0 0
        %362 = vperm.xlu0 %361, %v336
        %v363 = vpop.permute.xlu0 %362
        %366 = vset.pattern.permute.xlu0 0
        %367 = vperm.xlu0 %366, %v337
        %v368 = vpop.permute.xlu0 %367
        %371 = vset.pattern.permute.xlu0 0
        %372 = vperm.xlu0 %371, %v338
        %v373 = vpop.permute.xlu0 %372
        %376 = vset.pattern.permute.xlu0 0
        %377 = vperm.xlu0 %376, %v339
        %v378 = vpop.permute.xlu0 %377
        %381 = vset.pattern.permute.xlu0 0
        %382 = vperm.xlu0 %381, %v340
        %v383 = vpop.permute.xlu0 %382
        %386 = vset.pattern.permute.xlu0 0
        %387 = vperm.xlu0 %386, %v341
        %v388 = vpop.permute.xlu0 %387
        %391 = vset.pattern.permute.xlu0 0
        %392 = vperm.xlu0 %391, %v342
        %v393 = vpop.permute.xlu0 %392
        %396 = vset.pattern.permute.xlu0 0
        %397 = vperm.xlu0 %396, %v343
        %v398 = vpop.permute.xlu0 %397
        %401 = vset.pattern.permute.xlu0 0
        %402 = vperm.xlu0 %401, %v344
        %v403 = vpop.permute.xlu0 %402
        %406 = vset.pattern.permute.xlu0 0
        %407 = vperm.xlu0 %406, %v345
        %v408 = vpop.permute.xlu0 %407
        %411 = vset.pattern.permute.xlu0 0
        %412 = vperm.xlu0 %411, %v346
        %v413 = vpop.permute.xlu0 %412
        %416 = vset.pattern.permute.xlu0 0
        %417 = vperm.xlu0 %416, %v347
        %v418 = vpop.permute.xlu0 %417
        %421 = vset.pattern.permute.xlu0 0
        %422 = vperm.xlu0 %421, %v348
        %v423 = vpop.permute.xlu0 %422
        %426 = vset.pattern.permute.xlu0 0
        %427 = vperm.xlu0 %426, %v349
        %v428 = vpop.permute.xlu0 %427
        %v446 = vunpack.c.l.b16 %v318
        %v447 = vunpack.c.l.b16 %v319
        %v448 = vunpack.c.l.b16 %v320
        %v449 = vunpack.c.l.b16 %v321
        %v450 = vunpack.c.l.b16 %v322
        %v451 = vunpack.c.l.b16 %v323
        %v452 = vunpack.c.l.b16 %v324
        %v453 = vunpack.c.l.b16 %v325
        %v454 = vunpack.c.l.b16 %v326
        %v455 = vunpack.c.l.b16 %v327
        %v456 = vunpack.c.l.b16 %v328
        %v457 = vunpack.c.l.b16 %v329
        %v458 = vunpack.c.l.b16 %v330
        %v459 = vunpack.c.l.b16 %v331
        %v460 = vunpack.c.l.b16 %v332
        %v461 = vunpack.c.l.b16 %v333
        %v462 = vpack.c.b16 %v447, %v446
        %v463 = vpack.c.b16 %v449, %v448
        %v464 = vpack.c.b16 %v451, %v450
        %v465 = vpack.c.b16 %v453, %v452
        %v466 = vpack.c.b16 %v455, %v454
        %v467 = vpack.c.b16 %v457, %v456
        %v468 = vpack.c.b16 %v459, %v458
        %v469 = vpack.c.b16 %v461, %v460
        %v494 = vunpack.c.l.b16 %v302
        %v495 = vunpack.c.l.b16 %v303
        %v496 = vunpack.c.l.b16 %v304
        %v497 = vunpack.c.l.b16 %v305
        %v498 = vunpack.c.l.b16 %v306
        %v499 = vunpack.c.l.b16 %v307
        %v500 = vunpack.c.l.b16 %v308
        %v501 = vunpack.c.l.b16 %v309
        %v502 = vunpack.c.l.b16 %v310
        %v503 = vunpack.c.l.b16 %v311
        %v504 = vunpack.c.l.b16 %v312
        %v505 = vunpack.c.l.b16 %v313
        %v506 = vunpack.c.l.b16 %v314
        %v507 = vunpack.c.l.b16 %v315
        %v508 = vunpack.c.l.b16 %v316
        %v509 = vunpack.c.l.b16 %v317
        %v510 = vpack.c.b16 %v495, %v494
        %v511 = vpack.c.b16 %v497, %v496
        %v512 = vpack.c.b16 %v499, %v498
        %v513 = vpack.c.b16 %v501, %v500
        %v514 = vpack.c.b16 %v503, %v502
        %v515 = vpack.c.b16 %v505, %v504
        %v516 = vpack.c.b16 %v507, %v506
        %v517 = vpack.c.b16 %v509, %v508
        %526 = vmatpush.bf16.msra.mxu0 %v517
        %527 = vmatpush.bf16.msra.mxu0 %v516
        %528 = vmatpush.bf16.msra.mxu0 %v515
        %529 = vmatpush.bf16.msra.mxu0 %v514
        %530 = vmatpush.bf16.msra.mxu0 %v513
        %531 = vmatpush.bf16.msra.mxu0 %v512
        %532 = vmatpush.bf16.msra.mxu0 %v511
        %533 = vmatpush.bf16.msra.mxu0 %v510
        %534 = vmatmul.bf16.gmra.mxu0 %v462
        %v535 = vpop.f32.mrf.mxu0
        %v536 = vadd.f32 %v353, %v535
        %v537 = vpop.f32.mrf.mxu0
        %v538 = vadd.f32 %v358, %v537
        %539 = vmatmul.bf16.gmra.mxu0 %v463
        %v540 = vpop.f32.mrf.mxu0
        %v541 = vadd.f32 %v363, %v540
        %v542 = vpop.f32.mrf.mxu0
        %v543 = vadd.f32 %v368, %v542
        %544 = vmatmul.bf16.gmra.mxu0 %v464
        %v545 = vpop.f32.mrf.mxu0
        %v546 = vadd.f32 %v373, %v545
        %v547 = vpop.f32.mrf.mxu0
        %v548 = vadd.f32 %v378, %v547
        %549 = vmatmul.bf16.gmra.mxu0 %v465
        %v550 = vpop.f32.mrf.mxu0
        %v551 = vadd.f32 %v383, %v550
        %v552 = vpop.f32.mrf.mxu0
        %v553 = vadd.f32 %v388, %v552
        %554 = vmatmul.bf16.gmra.mxu0 %v466
        %v555 = vpop.f32.mrf.mxu0
        %v556 = vadd.f32 %v393, %v555
        %v557 = vpop.f32.mrf.mxu0
        %v558 = vadd.f32 %v398, %v557
        %559 = vmatmul.bf16.gmra.mxu0 %v467
        %v560 = vpop.f32.mrf.mxu0
        %v561 = vadd.f32 %v403, %v560
        %v562 = vpop.f32.mrf.mxu0
        %v563 = vadd.f32 %v408, %v562
        %564 = vmatmul.bf16.gmra.mxu0 %v468
        %v565 = vpop.f32.mrf.mxu0
        %v566 = vadd.f32 %v413, %v565
        %v567 = vpop.f32.mrf.mxu0
        %v568 = vadd.f32 %v418, %v567
        %569 = vmatmul.bf16.gmra.mxu0 %v469
        %v570 = vpop.f32.mrf.mxu0
        %v571 = vadd.f32 %v423, %v570
        %v572 = vpop.f32.mrf.mxu0
        %v573 = vadd.f32 %v428, %v572
        %574 = vdwg.mxu0
        %v575 = vmax.f32 %v536, 0.0
        %v576 = vmax.f32 %v538, 0.0
        %v577 = vmax.f32 %v541, 0.0
        %v578 = vmax.f32 %v543, 0.0
        %v579 = vmax.f32 %v546, 0.0
        %v580 = vmax.f32 %v548, 0.0
        %v581 = vmax.f32 %v551, 0.0
        %v582 = vmax.f32 %v553, 0.0
        %v583 = vmax.f32 %v556, 0.0
        %v584 = vmax.f32 %v558, 0.0
        %v585 = vmax.f32 %v561, 0.0
        %v586 = vmax.f32 %v563, 0.0
        %v587 = vmax.f32 %v566, 0.0
        %v588 = vmax.f32 %v568, 0.0
        %v589 = vmax.f32 %v571, 0.0
        %v590 = vmax.f32 %v573, 0.0
        %v591 = vld [vmem:[%s3] sm:$0xf]
        %v592 = vld [vmem:[%s3 + $0x4] sm:$0xf]
        %v593 = vld [vmem:[%s3 + $0x8] sm:$0xf]
        %v594 = vld [vmem:[%s3 + $0xc] sm:$0xf]
        %v595 = vld [vmem:[%s3 + $0x10] sm:$0xf]
        %v596 = vld [vmem:[%s3 + $0x14] sm:$0xf]
        %v597 = vld [vmem:[%s3 + $0x18] sm:$0xf]
        %v598 = vld [vmem:[%s3 + $0x1c] sm:$0xf]
        %v599 = vld [vmem:[%s3 + $0x20] sm:$0xf]
        %v600 = vld [vmem:[%s3 + $0x24] sm:$0xf]
        %v601 = vld [vmem:[%s3 + $0x28] sm:$0xf]
        %v602 = vld [vmem:[%s3 + $0x2c] sm:$0xf]
        %v603 = vld [vmem:[%s3 + $0x30] sm:$0xf]
        %v604 = vld [vmem:[%s3 + $0x34] sm:$0xf]
        %v605 = vld [vmem:[%s3 + $0x38] sm:$0xf]
        %v606 = vld [vmem:[%s3 + $0x3c] sm:$0xf]
        %v607 = vpack.c.bf16 %v576, %v575
        %v608 = vpack.c.bf16 %v578, %v577
        %v609 = vpack.c.bf16 %v580, %v579
        %v610 = vpack.c.bf16 %v582, %v581
        %v611 = vpack.c.bf16 %v584, %v583
        %v612 = vpack.c.bf16 %v586, %v585
        %v613 = vpack.c.bf16 %v588, %v587
        %v614 = vpack.c.bf16 %v590, %v589
        %v615 = vld [vmem:[%s4] sm:$0xff]
        %v616 = vld [vmem:[%s4 + $0x8] sm:$0xff]
        %v617 = vld [vmem:[%s4 + $0x10] sm:$0xff]
        %v618 = vld [vmem:[%s4 + $0x18] sm:$0xff]
        %v619 = vld [vmem:[%s4 + $0x20] sm:$0xff]
        %v620 = vld [vmem:[%s4 + $0x28] sm:$0xff]
        %v621 = vld [vmem:[%s4 + $0x30] sm:$0xff]
        %v622 = vld [vmem:[%s4 + $0x38] sm:$0xff]
        %v623 = vld [vmem:[%s4 + $0x40] sm:$0xff]
        %v624 = vld [vmem:[%s4 + $0x48] sm:$0xff]
        %v625 = vld [vmem:[%s4 + $0x50] sm:$0xff]
        %v626 = vld [vmem:[%s4 + $0x58] sm:$0xff]
        %v627 = vld [vmem:[%s4 + $0x60] sm:$0xff]
        %v628 = vld [vmem:[%s4 + $0x68] sm:$0xff]
        %v629 = vld [vmem:[%s4 + $0x70] sm:$0xff]
        %v630 = vld [vmem:[%s4 + $0x78] sm:$0xff]
        %632 = vset.pattern.permute.xlu0 0
        %633 = vperm.xlu0 %632, %v615
        %v634 = vpop.permute.xlu0 %633
        %637 = vset.pattern.permute.xlu0 0
        %638 = vperm.xlu0 %637, %v616
        %v639 = vpop.permute.xlu0 %638
        %642 = vset.pattern.permute.xlu0 0
        %643 = vperm.xlu0 %642, %v617
        %v644 = vpop.permute.xlu0 %643
        %647 = vset.pattern.permute.xlu0 0
        %648 = vperm.xlu0 %647, %v618
        %v649 = vpop.permute.xlu0 %648
        %652 = vset.pattern.permute.xlu0 0
        %653 = vperm.xlu0 %652, %v619
        %v654 = vpop.permute.xlu0 %653
        %657 = vset.pattern.permute.xlu0 0
        %658 = vperm.xlu0 %657, %v620
        %v659 = vpop.permute.xlu0 %658
        %662 = vset.pattern.permute.xlu0 0
        %663 = vperm.xlu0 %662, %v621
        %v664 = vpop.permute.xlu0 %663
        %667 = vset.pattern.permute.xlu0 0
        %668 = vperm.xlu0 %667, %v622
        %v669 = vpop.permute.xlu0 %668
        %672 = vset.pattern.permute.xlu0 0
        %673 = vperm.xlu0 %672, %v623
        %v674 = vpop.permute.xlu0 %673
        %677 = vset.pattern.permute.xlu0 0
        %678 = vperm.xlu0 %677, %v624
        %v679 = vpop.permute.xlu0 %678
        %682 = vset.pattern.permute.xlu0 0
        %683 = vperm.xlu0 %682, %v625
        %v684 = vpop.permute.xlu0 %683
        %687 = vset.pattern.permute.xlu0 0
        %688 = vperm.xlu0 %687, %v626
        %v689 = vpop.permute.xlu0 %688
        %692 = vset.pattern.permute.xlu0 0
        %693 = vperm.xlu0 %692, %v627
        %v694 = vpop.permute.xlu0 %693
        %697 = vset.pattern.permute.xlu0 0
        %698 = vperm.xlu0 %697, %v628
        %v699 = vpop.permute.xlu0 %698
        %702 = vset.pattern.permute.xlu0 0
        %703 = vperm.xlu0 %702, %v629
        %v704 = vpop.permute.xlu0 %703
        %707 = vset.pattern.permute.xlu0 0
        %708 = vperm.xlu0 %707, %v630
        %v709 = vpop.permute.xlu0 %708
        %v727 = vunpack.c.l.b16 %v591
        %v728 = vunpack.c.l.b16 %v592
        %v729 = vunpack.c.l.b16 %v593
        %v730 = vunpack.c.l.b16 %v594
        %v731 = vunpack.c.l.b16 %v595
        %v732 = vunpack.c.l.b16 %v596
        %v733 = vunpack.c.l.b16 %v597
        %v734 = vunpack.c.l.b16 %v598
        %v735 = vunpack.c.l.b16 %v599
        %v736 = vunpack.c.l.b16 %v600
        %v737 = vunpack.c.l.b16 %v601
        %v738 = vunpack.c.l.b16 %v602
        %v739 = vunpack.c.l.b16 %v603
        %v740 = vunpack.c.l.b16 %v604
        %v741 = vunpack.c.l.b16 %v605
        %v742 = vunpack.c.l.b16 %v606
        %v743 = vpack.c.b16 %v728, %v727
        %v744 = vpack.c.b16 %v730, %v729
        %v745 = vpack.c.b16 %v732, %v731
        %v746 = vpack.c.b16 %v734, %v733
        %v747 = vpack.c.b16 %v736, %v735
        %v748 = vpack.c.b16 %v738, %v737
        %v749 = vpack.c.b16 %v740, %v739
        %v750 = vpack.c.b16 %v742, %v741
        %759 = vmatpush.bf16.msra.mxu0 %v614
        %760 = vmatpush.bf16.msra.mxu0 %v613
        %761 = vmatpush.bf16.msra.mxu0 %v612
        %762 = vmatpush.bf16.msra.mxu0 %v611
        %763 = vmatpush.bf16.msra.mxu0 %v610
        %764 = vmatpush.bf16.msra.mxu0 %v609
        %765 = vmatpush.bf16.msra.mxu0 %v608
        %766 = vmatpush.bf16.msra.mxu0 %v607
        %767 = vmatmul.bf16.gmra.mxu0 %v743
        %v768 = vpop.f32.mrf.mxu0
        %v769 = vadd.f32 %v634, %v768
        %v770 = vpop.f32.mrf.mxu0
        %v771 = vadd.f32 %v639, %v770
        %772 = vmatmul.bf16.gmra.mxu0 %v744
        %v773 = vpop.f32.mrf.mxu0
        %v774 = vadd.f32 %v644, %v773
        %v775 = vpop.f32.mrf.mxu0
        %v776 = vadd.f32 %v649, %v775
        %777 = vmatmul.bf16.gmra.mxu0 %v745
        %v778 = vpop.f32.mrf.mxu0
        %v779 = vadd.f32 %v654, %v778
        %v780 = vpop.f32.mrf.mxu0
        %v781 = vadd.f32 %v659, %v780
        %782 = vmatmul.bf16.gmra.mxu0 %v746
        %v783 = vpop.f32.mrf.mxu0
        %v784 = vadd.f32 %v664, %v783
        %v785 = vpop.f32.mrf.mxu0
        %v786 = vadd.f32 %v669, %v785
        %787 = vmatmul.bf16.gmra.mxu0 %v747
        %v788 = vpop.f32.mrf.mxu0
        %v789 = vadd.f32 %v674, %v788
        %v790 = vpop.f32.mrf.mxu0
        %v791 = vadd.f32 %v679, %v790
        %792 = vmatmul.bf16.gmra.mxu0 %v748
        %v793 = vpop.f32.mrf.mxu0
        %v794 = vadd.f32 %v684, %v793
        %v795 = vpop.f32.mrf.mxu0
        %v796 = vadd.f32 %v689, %v795
        %797 = vmatmul.bf16.gmra.mxu0 %v749
        %v798 = vpop.f32.mrf.mxu0
        %v799 = vadd.f32 %v694, %v798
        %v800 = vpop.f32.mrf.mxu0
        %v801 = vadd.f32 %v699, %v800
        %802 = vmatmul.bf16.gmra.mxu0 %v750
        %v803 = vpop.f32.mrf.mxu0
        %v804 = vadd.f32 %v704, %v803
        %v805 = vpop.f32.mrf.mxu0
        %v806 = vadd.f32 %v709, %v805
        %807 = vdwg.mxu0
        %v808 = vmax.f32 %v769, 0.0
        %v809 = vmax.f32 %v771, 0.0
        %v810 = vmax.f32 %v774, 0.0
        %v811 = vmax.f32 %v776, 0.0
        %v812 = vmax.f32 %v779, 0.0
        %v813 = vmax.f32 %v781, 0.0
        %v814 = vmax.f32 %v784, 0.0
        %v815 = vmax.f32 %v786, 0.0
        %v816 = vmax.f32 %v789, 0.0
        %v817 = vmax.f32 %v791, 0.0
        %v818 = vmax.f32 %v794, 0.0
        %v819 = vmax.f32 %v796, 0.0
        %v820 = vmax.f32 %v799, 0.0
        %v821 = vmax.f32 %v801, 0.0
        %v822 = vmax.f32 %v804, 0.0
        %v823 = vmax.f32 %v806, 0.0
        %v824 = vld [vmem:[%s5] sm:$0xf]
        %v825 = vpack.c.bf16 %v809, %v808
        %v826 = vpack.c.bf16 %v811, %v810
        %v827 = vpack.c.bf16 %v813, %v812
        %v828 = vpack.c.bf16 %v815, %v814
        %v829 = vpack.c.bf16 %v817, %v816
        %v830 = vpack.c.bf16 %v819, %v818
        %v831 = vpack.c.bf16 %v821, %v820
        %v832 = vpack.c.bf16 %v823, %v822
        %v833 = vld [vmem:[%s6] sm:$0xff]
        %835 = vset.pattern.permute.xlu0 0
        %836 = vperm.xlu0 %835, %v833
        %v837 = vpop.permute.xlu0 %836
        %839 = vmatpush.bf16.msra.mxu0 %v832
        %840 = vmatpush.bf16.msra.mxu0 %v831
        %841 = vmatpush.bf16.msra.mxu0 %v830
        %842 = vmatpush.bf16.msra.mxu0 %v829
        %843 = vmatpush.bf16.msra.mxu0 %v828
        %844 = vmatpush.bf16.msra.mxu0 %v827
        %845 = vmatpush.bf16.msra.mxu0 %v826
        %846 = vmatpush.bf16.msra.mxu0 %v825
        %847 = vmatmul.bf16.gmra.mxu0 %v824
        %v848 = vpop.f32.mrf.mxu0
        %v849 = vadd.f32 %v837, %v848
        %v850 = vpop.f32.mrf.mxu0
        %851 = vdwg.mxu0
        %vm852 = vcmask 523264
        %853 = vst.msk [vmem:[%s293] sm:$0xff] %vm852, %v849
        %s854 = sand.u32 %s197, 1
        %s855 = scalar_lea.sflag [#allocation3], %s854
        %s856 = sand.u32 %s197, 1
        %s857 = smul.addr %s856, 8
        %s858 = scalar_lea.vmem [#allocation2], %s857
        // Predicated region
        $region49: #{tpu_custom_call.1} parent=47 // pred_check
          %p859 = pneg %p207
        $region50: #{tpu_custom_call.1} parent=47 // pred_check_branch
          %861 = sbr.rel (%p859) target = $region52
        $region51: #{tpu_custom_call.1} parent=47 // pred_region
          %863 = vsyncadd %s855, 0
          %s864 = sadd.s32 %s26, %s25
          %s865 = smul.addr %s864, 8
          %s866 = scalar_lea.hbm %s7, %s865
          %s868 = sshll.u32 %s858, 4
          %s869 = int_to_ptr.vmem [resolvable:$true] %s868
          %s870 = sshll.u32 %s866, 4
          %s871 = int_to_ptr.hbm [resolvable:$true] %s870
          %873 = dma.vmem_to_hbm [thread:$0]  %s869, 128, %s871, %s855
        $region52: #{tpu_custom_call.1} parent=47 // pred_fallthru
          _
      $region48: #{tpu_custom_call.1} parent=5 // pred_fallthru
        _
      %p874 = scmp.le.s32.totalorder 2, %s16
      // Predicated region
      $region53: #{tpu_custom_call.1} parent=5 // pred_check
        %p875 = pneg %p874
      $region54: #{tpu_custom_call.1} parent=5 // pred_check_branch
        %877 = sbr.rel (%p875) target = $region56
      $region55: #{tpu_custom_call.1} parent=5 // pred_region
        %s878 = ssub.s32 %s16, 2
        // Predicated region
        $region57: #{tpu_custom_call.1} parent=55 // pred_check
          %p879 = pneg %p213
        $region58: #{tpu_custom_call.1} parent=55 // pred_check_branch
          %881 = sbr.rel (%p879) target = $region60
        $region59: #{tpu_custom_call.1} parent=55 // pred_region
          %s882 = sand.u32 %s198, 1
          %s883 = scalar_lea.sflag [#allocation3], %s882
          %s884 = sand.u32 %s198, 1
          %s885 = smul.addr %s884, 8
          %s886 = scalar_lea.vmem [#allocation2], %s885
          %888 = dma.done %s883, 128
        $region60: #{tpu_custom_call.1} parent=55 // pred_fallthru
          _
      $region56: #{tpu_custom_call.1} parent=5 // pred_fallthru
        _
    $region6: #{tpu_custom_call.1} parent=1 // loop_footer
      %s20 = sadd.s32 1, %s16
    $region7: #{tpu_custom_call.1} parent=1 // loop_footer_branch
      %15 = sbr.rel target = $region3
    $region8: #{tpu_custom_call.1} parent=1 // loop_exit
      _
    %889 = vsyncpa [#allocation3], 1
    %s890 = scalar_lea.sflag [#allocation3], 1
    %891 = vsyncpa %s890, 1

</llo_original>
